<compile_context>
chip_gen: v7x
topology: tpu7x:2x2x1
jax: 0.10.0
libtpu: 0.0.40
codegen_flags: <defaults>
</compile_context>

<pallas_src>
import jax
import jax.numpy as jnp
from jax.experimental import pallas as pl
from jax.experimental.pallas import tpu as pltpu

BN_EPS = 1e-5

# register_buffer values from the PyTorch module.
GRI_NORMAL_MU, GRI_NORMAL_SIGMA = 8.68, 1.67
GRI_ABNORMAL_MU, GRI_ABNORMAL_SIGMA = 4.84, 2.08


def _round_up(n, m):
    return ((n + m - 1) // m) * m


def _cdiv(a, b):
    return (a + b - 1) // b


def glaucoma_kernel(x_ref, w1_ref, w2_ref, b2_ref, w3_ref, b3_ref, out_ref):
    x = x_ref[...]                                     # (7, TB) f32; row 6 = ones
    g = x[5:6, :]                                      # GRI feature, kept in f32

    xb = x.astype(jnp.bfloat16)

    # Linear(6,64)+BN(folded)+ReLU; layer-1 bias folded into column 6 of w1
    # (multiplied by the ones row of x).  Dropout: identity in eval.
    h = jnp.dot(w1_ref[...], xb, preferred_element_type=jnp.float32)
    h = jnp.maximum(h, 0.0)                            # (64, TB) f32

    # Linear(64,32)+BN(folded)+ReLU
    h = jnp.dot(w2_ref[...], h.astype(jnp.bfloat16),
                preferred_element_type=jnp.float32) + b2_ref[...]
    h = jnp.maximum(h, 0.0)                            # (32, TB) f32

    # Linear(32,1) + Sigmoid.
    # NOTE: if bundle dumps ever show the MXU (vector-extended) slot saturating,
    # this M=1 dot can be moved to the VPU/XLU as
    #   jnp.sum(w3_col * h, axis=0, keepdims=True); kept on the MXU here since
    # the bf16 cast already cut the vmatmul push count ~3x.
    logits = jnp.dot(w3_ref[...], h.astype(jnp.bfloat16),
                     preferred_element_type=jnp.float32) + b3_ref[...]   # (1, TB)

    # Numerically stable two-sided sigmoid with a single EUP reciprocal.
    neg = jnp.where(logits >= 0.0, -logits, logits)    # always <= 0
    e = jnp.exp(neg)
    r = pl.reciprocal(1.0 + e, approx=True)            # EUP slot, computed once
    sig = jnp.where(logits >= 0.0, r, e * r)

    # GRI rule: exp(-0.5*za^2) > exp(-0.5*zn^2)  <=>  za^2 < zn^2  (f32 throughout).
    zn = (g - GRI_NORMAL_MU) * (1.0 / GRI_NORMAL_SIGMA)
    za = (g - GRI_ABNORMAL_MU) * (1.0 / GRI_ABNORMAL_SIGMA)
    gri_pred = (za * za < zn * zn).astype(jnp.float32)

    # Two single-sublane stores into the lane-dense (2, TB) output slab.
    # (Could be fused into one store via a sublane concatenate if the single
    #  vst slot ever binds; this kernel is MXU/VALU-limited, not store-limited.)
    out_ref[0:1, :] = sig
    out_ref[1:2, :] = gri_pred


def fold_params(p, *, matmul_dtype=jnp.bfloat16):
    """Fold eval-mode BatchNorm into the preceding Linear and pre-cast the
    matmul weights to bf16 (host-side, one time)."""
    s1 = p["g1"] / jnp.sqrt(p["v1"] + BN_EPS)                         # (64,)
    w1f = p["w1"] * s1[:, None]                                       # (64, 6)
    b1f = ((p["b1"] - p["m1"]) * s1 + p["be1"])[:, None]              # (64, 1)
    w1_aug = jnp.concatenate([w1f, b1f], axis=1).astype(matmul_dtype)  # (64, 7)

    s2 = p["g2"] / jnp.sqrt(p["v2"] + BN_EPS)                         # (32,)
    w2f = (p["w2"] * s2[:, None]).astype(matmul_dtype)                # (32, 64)
    b2f = ((p["b2"] - p["m2"]) * s2 + p["be2"])[:, None]              # (32, 1) f32

    w3 = p["w3"].astype(matmul_dtype)                                 # (1, 32)
    b3 = p["b3"][:, None]                                             # (1, 1) f32
    return w1_aug, w2f, b2f, w3, b3


def glaucoma_forward(x, params, *, tb_max=16384, feature_major=False):
    """x: (B, 6) f32 (or (6, B) if feature_major=True).
    Returns (fc_out (B,1), gri_pred (B,1))."""
    w1_aug, w2f, b2f, w3, b3 = fold_params(params)

    # Ideally the producer hands us feature-major data directly (feature_major=True)
    # so no transpose pass is needed; otherwise transpose here (wrapper-side).
    if feature_major:
        xT = x.astype(jnp.float32)                     # (6, B)
        B = xT.shape[1]
    else:
        B = x.shape[0]
        xT = x.astype(jnp.float32).T                   # (6, B)

    # Tile selection: multiple of 128 lanes, target >= 4 grid steps so both v7x
    # TensorCores get work and the DMA pipeline overlaps; cap at tb_max.
    b128 = _round_up(max(B, 1), 128)
    tb = min(tb_max, max(128, _round_up(_cdiv(b128, 4), 128)))
    B_pad = _round_up(B, tb)

    # Append the ones row (layer-1 bias term) and pad the batch to B_pad.
    x_t = jnp.pad(
        jnp.concatenate([xT, jnp.ones((1, B), jnp.float32)], axis=0),
        ((0, 0), (0, B_pad - B)),
    )                                                  # (7, B_pad)

    def resident(shape):
        # Weights/biases: constant index_map -> stay VMEM-resident across tiles.
        return pl.BlockSpec(shape, lambda i: (0, 0))

    packed = pl.pallas_call(
        glaucoma_kernel,
        out_shape=jax.ShapeDtypeStruct((2, B_pad), jnp.float32),
        grid=(B_pad // tb,),
        in_specs=[
            pl.BlockSpec((7, tb), lambda i: (0, i)),   # streamed batch tile
            resident(w1_aug.shape),
            resident(w2f.shape), resident(b2f.shape),
            resident(w3.shape), resident(b3.shape),
        ],
        out_specs=pl.BlockSpec((2, tb), lambda i: (0, i)),
        compiler_params=pltpu.CompilerParams(
            dimension_semantics=("parallel",),          # shard batch tiles across TCs
            vmem_limit_bytes=48 * 1024 * 1024,          # clear v5e's 16 MiB default
        ),
    )(x_t, w1_aug, w2f, b2f, w3, b3)

    fc_out = packed[0, :B].reshape(B, 1)
    gri_pred = packed[1, :B].reshape(B, 1)
    return fc_out, gri_pred


def init_params(key):
    """Deterministic init matching the PyTorch module (Linear weight = (out, in)).

    BatchNorm: gamma=1, beta=0, running_mean=0, running_var=1 (fresh init).
    """
    k1, k2, k3, k4, k5, k6 = jax.random.split(key, 6)

    def lin(kw, kb, fan_in, fan_out):
        bound = 1.0 / jnp.sqrt(jnp.float32(fan_in))
        w = jax.random.uniform(kw, (fan_out, fan_in), jnp.float32, -bound, bound)
        b = jax.random.uniform(kb, (fan_out,), jnp.float32, -bound, bound)
        return w, b

    w1, b1 = lin(k1, k2, 6, 64)
    w2, b2 = lin(k3, k4, 64, 32)
    w3, b3 = lin(k5, k6, 32, 1)

    def bn(n):
        return (jnp.ones((n,), jnp.float32),    # gamma
                jnp.zeros((n,), jnp.float32),   # beta
                jnp.zeros((n,), jnp.float32),   # running_mean
                jnp.ones((n,), jnp.float32))    # running_var

    g1, be1, m1, v1 = bn(64)
    g2, be2, m2, v2 = bn(32)

    return dict(
        w1=w1, b1=b1, g1=g1, be1=be1, m1=m1, v1=v1,
        w2=w2, b2=b2, g2=g2, be2=be2, m2=m2, v2=v2,
        w3=w3, b3=b3,
    )


def reference_forward(x, p):
    """Pure-JAX f32 reference of the eval-mode PyTorch forward (unfolded params)."""
    h = x @ p["w1"].T + p["b1"]
    h = (h - p["m1"]) / jnp.sqrt(p["v1"] + BN_EPS) * p["g1"] + p["be1"]
    h = jnp.maximum(h, 0.0)
    h = h @ p["w2"].T + p["b2"]
    h = (h - p["m2"]) / jnp.sqrt(p["v2"] + BN_EPS) * p["g2"] + p["be2"]
    h = jnp.maximum(h, 0.0)
    fc = jax.nn.sigmoid(h @ p["w3"].T + p["b3"])
    gri = x[:, 5:6]
    n_p = jnp.exp(-0.5 * ((gri - GRI_NORMAL_MU) / GRI_NORMAL_SIGMA) ** 2)
    a_p = jnp.exp(-0.5 * ((gri - GRI_ABNORMAL_MU) / GRI_ABNORMAL_SIGMA) ** 2)
    return fc, (a_p > n_p).astype(jnp.float32)


if __name__ == "__main__":
    key = jax.random.PRNGKey(0)
    kx, kx2, kx3, kp = jax.random.split(key, 4)
    params = init_params(kp)

    # bf16 matmul operands (f32 accumulate) -> compare to the f32 reference
    # with a tolerance comfortably above the bf16 rounding noise on sigmoid(.).
    FC_ATOL = 2e-2

    # Test 1: small batch (single grid step); feature 5 is GRI (~0..10).
    B = 8
    x = jax.random.uniform(kx, (B, 6), jnp.float32, 0.0, 10.0)
    fc_out, gri_pred = glaucoma_forward(x, params)
    fc_out, gri_pred = jax.block_until_ready((fc_out, gri_pred))
    fc_ref, gri_ref = reference_forward(x, params)
    assert fc_out.shape == (B, 1) and gri_pred.shape == (B, 1)
    assert bool(jnp.all((fc_out >= 0.0) & (fc_out <= 1.0)))
    assert jnp.allclose(fc_out, fc_ref, atol=FC_ATOL)
    assert jnp.array_equal(gri_pred, gri_ref)

    # Test 2: non-multiple-of-128 batch with a small tile cap to exercise the
    # multi-step grid, padding, and resident-weight path.
    B2 = 300
    x2 = jax.random.uniform(kx2, (B2, 6), jnp.float32, 0.0, 10.0)
    fc2, gri2 = glaucoma_forward(x2, params, tb_max=128)
    fc2, gri2 = jax.block_until_ready((fc2, gri2))
    fc2_ref, gri2_ref = reference_forward(x2, params)
    assert jnp.allclose(fc2, fc2_ref, atol=FC_ATOL)
    assert jnp.array_equal(gri2, gri2_ref)

    # Test 3: mid-size batch with default tb_max -> >= 4 grid steps via the
    # tile-selection heuristic (exercises the multi-TensorCore-friendly path).
    B3 = 1000
    x3 = jax.random.uniform(kx3, (B3, 6), jnp.float32, 0.0, 10.0)
    fc3, gri3 = glaucoma_forward(x3, params)
    fc3, gri3 = jax.block_until_ready((fc3, gri3))
    fc3_ref, gri3_ref = reference_forward(x3, params)
    assert jnp.allclose(fc3, fc3_ref, atol=FC_ATOL)
    assert jnp.array_equal(gri3, gri3_ref)

    print("KERNEL_OK")
</pallas_src>

<mosaic_0001>
module attributes {stable_mosaic.version = 11 : i64} {
  func.func @glaucoma_kernel(%arg0: i32, %arg1: memref<7x128xf32, #tpu.memory_space<vmem>>, %arg2: memref<64x7xbf16, #tpu.memory_space<vmem>>, %arg3: memref<32x64xbf16, #tpu.memory_space<vmem>>, %arg4: memref<32x1xf32, #tpu.memory_space<vmem>>, %arg5: memref<1x32xbf16, #tpu.memory_space<vmem>>, %arg6: memref<1x1xf32, #tpu.memory_space<vmem>>, %arg7: memref<2x128xf32, #tpu.memory_space<vmem>>) attributes {dimension_semantics = [#tpu.dimension_semantics<parallel>], iteration_bounds = array<i64: 1>, scalar_prefetch = 0 : i64, scratch_operands = 0 : i64, tpu.core_type = #tpu.core_type<tc>, window_params = [{transform_indices = @transform_0, window_bounds = array<i64: 7, 128>}, {pipeline_mode = #tpu.pipeline_mode<synchronous>, transform_indices = @transform_1, window_bounds = array<i64: 64, 7>}, {pipeline_mode = #tpu.pipeline_mode<synchronous>, transform_indices = @transform_2, window_bounds = array<i64: 32, 64>}, {pipeline_mode = #tpu.pipeline_mode<synchronous>, transform_indices = @transform_3, window_bounds = array<i64: 32, 1>}, {pipeline_mode = #tpu.pipeline_mode<synchronous>, transform_indices = @transform_4, window_bounds = array<i64: 1, 32>}, {pipeline_mode = #tpu.pipeline_mode<synchronous>, transform_indices = @transform_5, window_bounds = array<i64: 1, 1>}, {transform_indices = @transform_6, window_bounds = array<i64: 2, 128>}]} {
    %c0 = arith.constant 0 : index
    %c0_0 = arith.constant 0 : index
    %0 = vector.load %arg1[%c0, %c0_0] : memref<7x128xf32, #tpu.memory_space<vmem>>, vector<7x128xf32>
    %1 = vector.extract_strided_slice %0 {offsets = [5, 0], sizes = [1, 128], strides = [1, 1]} : vector<7x128xf32> to vector<1x128xf32>
    %2 = arith.truncf %0 : vector<7x128xf32> to vector<7x128xbf16>
    %c0_1 = arith.constant 0 : index
    %c0_2 = arith.constant 0 : index
    %3 = vector.load %arg2[%c0_1, %c0_2] : memref<64x7xbf16, #tpu.memory_space<vmem>>, vector<64x7xbf16>
    %cst = arith.constant dense<0.000000e+00> : vector<64x128xf32>
    %4 = tpu.matmul %3, %2, %cst {dimension_numbers = #tpu.dot_dimension_numbers<[1], [0], [0], [1], [0, 0, 1, 1], [], []>} : vector<64x7xbf16>, vector<7x128xbf16>, vector<64x128xf32> -> vector<64x128xf32>
    %cst_3 = arith.constant 0.000000e+00 : f32
    %5 = vector.broadcast %cst_3 : f32 to vector<64x128xf32>
    %6 = arith.maximumf %4, %5 : vector<64x128xf32>
    %c0_4 = arith.constant 0 : index
    %c0_5 = arith.constant 0 : index
    %7 = vector.load %arg3[%c0_4, %c0_5] : memref<32x64xbf16, #tpu.memory_space<vmem>>, vector<32x64xbf16>
    %8 = arith.truncf %6 : vector<64x128xf32> to vector<64x128xbf16>
    %cst_6 = arith.constant dense<0.000000e+00> : vector<32x128xf32>
    %9 = tpu.matmul %7, %8, %cst_6 {dimension_numbers = #tpu.dot_dimension_numbers<[1], [0], [0], [1], [0, 0, 1, 1], [], []>} : vector<32x64xbf16>, vector<64x128xbf16>, vector<32x128xf32> -> vector<32x128xf32>
    %c0_7 = arith.constant 0 : index
    %c0_8 = arith.constant 0 : index
    %10 = vector.load %arg4[%c0_7, %c0_8] : memref<32x1xf32, #tpu.memory_space<vmem>>, vector<32x1xf32>
    %11 = vector.broadcast %10 : vector<32x1xf32> to vector<32x128xf32>
    %12 = arith.addf %9, %11 : vector<32x128xf32>
    %cst_9 = arith.constant 0.000000e+00 : f32
    %13 = vector.broadcast %cst_9 : f32 to vector<32x128xf32>
    %14 = arith.maximumf %12, %13 : vector<32x128xf32>
    %c0_10 = arith.constant 0 : index
    %c0_11 = arith.constant 0 : index
    %15 = vector.load %arg5[%c0_10, %c0_11] : memref<1x32xbf16, #tpu.memory_space<vmem>>, vector<1x32xbf16>
    %16 = arith.truncf %14 : vector<32x128xf32> to vector<32x128xbf16>
    %cst_12 = arith.constant dense<0.000000e+00> : vector<1x128xf32>
    %17 = tpu.matmul %15, %16, %cst_12 {dimension_numbers = #tpu.dot_dimension_numbers<[1], [0], [0], [1], [0, 0, 1, 1], [], []>} : vector<1x32xbf16>, vector<32x128xbf16>, vector<1x128xf32> -> vector<1x128xf32>
    %c0_13 = arith.constant 0 : index
    %c0_14 = arith.constant 0 : index
    %18 = vector.load %arg6[%c0_13, %c0_14] : memref<1x1xf32, #tpu.memory_space<vmem>>, vector<1x1xf32>
    %19 = vector.broadcast %18 : vector<1x1xf32> to vector<1x128xf32>
    %20 = arith.addf %17, %19 : vector<1x128xf32>
    %cst_15 = arith.constant 0.000000e+00 : f32
    %21 = vector.broadcast %cst_15 : f32 to vector<1x128xf32>
    %22 = arith.cmpf oge, %20, %21 : vector<1x128xf32>
    %cst_16 = arith.constant 0.000000e+00 : f32
    %23 = vector.broadcast %cst_16 : f32 to vector<1x128xf32>
    %24 = arith.subf %23, %20 : vector<1x128xf32>
    %25 = arith.select %22, %24, %20 : vector<1x128xi1>, vector<1x128xf32>
    %26 = math.exp %25 : vector<1x128xf32>
    %cst_17 = arith.constant 1.000000e+00 : f32
    %27 = vector.broadcast %cst_17 : f32 to vector<1x128xf32>
    %28 = arith.addf %27, %26 : vector<1x128xf32>
    %29 = tpu.reciprocal %28 {approx = true} : vector<1x128xf32> -> vector<1x128xf32>
    %cst_18 = arith.constant 0.000000e+00 : f32
    %30 = vector.broadcast %cst_18 : f32 to vector<1x128xf32>
    %31 = arith.cmpf oge, %20, %30 : vector<1x128xf32>
    %32 = arith.mulf %26, %29 : vector<1x128xf32>
    %33 = arith.select %31, %29, %32 : vector<1x128xi1>, vector<1x128xf32>
    %cst_19 = arith.constant 8.680000e+00 : f32
    %34 = vector.broadcast %cst_19 : f32 to vector<1x128xf32>
    %35 = arith.subf %1, %34 : vector<1x128xf32>
    %cst_20 = arith.constant 0.598802388 : f32
    %36 = vector.broadcast %cst_20 : f32 to vector<1x128xf32>
    %37 = arith.mulf %35, %36 : vector<1x128xf32>
    %cst_21 = arith.constant 4.840000e+00 : f32
    %38 = vector.broadcast %cst_21 : f32 to vector<1x128xf32>
    %39 = arith.subf %1, %38 : vector<1x128xf32>
    %cst_22 = arith.constant 0.480769217 : f32
    %40 = vector.broadcast %cst_22 : f32 to vector<1x128xf32>
    %41 = arith.mulf %39, %40 : vector<1x128xf32>
    %42 = arith.mulf %41, %41 : vector<1x128xf32>
    %43 = arith.mulf %37, %37 : vector<1x128xf32>
    %44 = arith.cmpf olt, %42, %43 : vector<1x128xf32>
    %45 = arith.extui %44 : vector<1x128xi1> to vector<1x128xi32>
    %46 = arith.sitofp %45 : vector<1x128xi32> to vector<1x128xf32>
    %c0_23 = arith.constant 0 : index
    %c0_24 = arith.constant 0 : index
    %47 = vector.load %arg7[%c0_23, %c0_24] : memref<2x128xf32, #tpu.memory_space<vmem>>, vector<1x128xf32>
    tpu.vector_store %arg7[%c0_23, %c0_24], %33 {strides = array<i32>} : memref<2x128xf32, #tpu.memory_space<vmem>>, vector<1x128xf32>,
    %c1 = arith.constant 1 : index
    %c0_25 = arith.constant 0 : index
    %48 = vector.load %arg7[%c1, %c0_25] : memref<2x128xf32, #tpu.memory_space<vmem>>, vector<1x128xf32>
    tpu.vector_store %arg7[%c1, %c0_25], %46 {strides = array<i32>} : memref<2x128xf32, #tpu.memory_space<vmem>>, vector<1x128xf32>,
    return
  }
  func.func @transform_0(%arg0: i32) -> (i32, i32) {
    %c0_i32 = arith.constant 0 : i32
    %c0_i32_0 = arith.constant 0 : i32
    return %c0_i32, %arg0 : i32, i32
  }
  func.func @transform_1(%arg0: i32) -> (i32, i32) {
    %c0_i32 = arith.constant 0 : i32
    %c0_i32_0 = arith.constant 0 : i32
    %c0_i32_1 = arith.constant 0 : i32
    return %c0_i32, %c0_i32_0 : i32, i32
  }
  func.func @transform_2(%arg0: i32) -> (i32, i32) {
    %c0_i32 = arith.constant 0 : i32
    %c0_i32_0 = arith.constant 0 : i32
    %c0_i32_1 = arith.constant 0 : i32
    return %c0_i32, %c0_i32_0 : i32, i32
  }
  func.func @transform_3(%arg0: i32) -> (i32, i32) {
    %c0_i32 = arith.constant 0 : i32
    %c0_i32_0 = arith.constant 0 : i32
    %c0_i32_1 = arith.constant 0 : i32
    return %c0_i32, %c0_i32_0 : i32, i32
  }
  func.func @transform_4(%arg0: i32) -> (i32, i32) {
    %c0_i32 = arith.constant 0 : i32
    %c0_i32_0 = arith.constant 0 : i32
    %c0_i32_1 = arith.constant 0 : i32
    return %c0_i32, %c0_i32_0 : i32, i32
  }
  func.func @transform_5(%arg0: i32) -> (i32, i32) {
    %c0_i32 = arith.constant 0 : i32
    %c0_i32_0 = arith.constant 0 : i32
    %c0_i32_1 = arith.constant 0 : i32
    return %c0_i32, %c0_i32_0 : i32, i32
  }
  func.func @transform_6(%arg0: i32) -> (i32, i32) {
    %c0_i32 = arith.constant 0 : i32
    %c0_i32_0 = arith.constant 0 : i32
    return %c0_i32, %arg0 : i32, i32
  }
}

</mosaic_0001>

<llo_original>
// kernel: tpu_custom_call.1
$region0: #{tpu_custom_call.1}
  #allocation0 [shape = 'u32[]', space=smem, size = 0x4, offset = 0x4, fixed_abs, tag = 'smem constant byte address 0x4 - core index']
  #allocation1 [shape = 'u32[144,128]{1,0:T(1,128)}', space=vmem, size = 0x12000, scoped, tag = 'internal scratch']
  #allocation2 [shape = 'f32[1,1]{1,0:T(1,128)S(1)}', space=vmem, size = 0x200, scoped, tag = 'scoped memory for tpu_custom_call.1']
  %s0 = inlined_call_operand.vmem [shape: f32[7,128], index: 0, kind: input, shape index: {}]
  %s1 = inlined_call_operand.vmem [shape: bf16[64,7], index: 1, kind: input, shape index: {}]
  %s2 = inlined_call_operand.vmem [shape: bf16[32,64], index: 2, kind: input, shape index: {}]
  %s3 = inlined_call_operand.vmem [shape: f32[32,1], index: 3, kind: input, shape index: {}]
  %s4 = inlined_call_operand.vmem [shape: bf16[1,32], index: 4, kind: input, shape index: {}]
  %s5 = inlined_call_operand.<no memory space> [shape: f32[1,1], index: 5, kind: input, shape index: {}]
  %s6 = inlined_call_operand.hbm [shape: f32[2,128], index: 6, kind: output, shape index: {}]
  %s7 = sld [smem:[#allocation0]]
  $region34: #{tpu_custom_call.1} parent=0
    _
  %s9 = ssub.s32 1, %s7
  %s10 = scalar_select 0, %s9, %s7
  %v11 = vstv %s5
  %12 = vst [vmem:[#allocation2] sm:$0x1] %v11
  $region1: #{tpu_custom_call.1} parent=0
    #allocation3 [shape = 'u8[1024]{0}', space=vmem, size = 0x400, scoped, tag = 'output window, operand 0, single buffered']
    #allocation4 [shape = 's32[1]{0}', space=sflag, size = 0x4, scoped, tag = 'scoped memory for tpu_custom_call.1']
    %13 = vsyncpa [#allocation4], 0
    // Predicated region
    $region2: #{tpu_custom_call.1} parent=1 // pred_check
      _
    $region3: #{tpu_custom_call.1} parent=1 // pred_check_branch
      %15 = sbr.rel (0) target = $region5
    $region4: #{tpu_custom_call.1} parent=1 // pred_region
      _
    $region5: #{tpu_custom_call.1} parent=1 // pred_fallthru
      _
    // Predicated region
    $region6: #{tpu_custom_call.1} parent=1 // pred_check
      _
    $region7: #{tpu_custom_call.1} parent=1 // pred_check_branch
      %17 = sbr.rel (0) target = $region9
    $region8: #{tpu_custom_call.1} parent=1 // pred_region
      _
    $region9: #{tpu_custom_call.1} parent=1 // pred_fallthru
      _
    // Predicated region
    $region10: #{tpu_custom_call.1} parent=1 // pred_check
      _
    $region11: #{tpu_custom_call.1} parent=1 // pred_check_branch
      %19 = sbr.rel (0) target = $region13
    $region12: #{tpu_custom_call.1} parent=1 // pred_region
      _
    $region13: #{tpu_custom_call.1} parent=1 // pred_fallthru
      _
    // Predicated region
    $region14: #{tpu_custom_call.1} parent=1 // pred_check
      _
    $region15: #{tpu_custom_call.1} parent=1 // pred_check_branch
      %21 = sbr.rel (0) target = $region17
    $region16: #{tpu_custom_call.1} parent=1 // pred_region
      _
    $region17: #{tpu_custom_call.1} parent=1 // pred_fallthru
      _
    // Predicated region
    $region18: #{tpu_custom_call.1} parent=1 // pred_check
      _
    $region19: #{tpu_custom_call.1} parent=1 // pred_check_branch
      %23 = sbr.rel (0) target = $region21
    $region20: #{tpu_custom_call.1} parent=1 // pred_region
      _
    $region21: #{tpu_custom_call.1} parent=1 // pred_fallthru
      _
    // Predicated region
    $region22: #{tpu_custom_call.1} parent=1 // pred_check
      _
    $region23: #{tpu_custom_call.1} parent=1 // pred_check_branch
      %25 = sbr.rel (0) target = $region25
    $region24: #{tpu_custom_call.1} parent=1 // pred_region
      _
    $region25: #{tpu_custom_call.1} parent=1 // pred_fallthru
      _
    %v27 = vld [vmem:[%s0] sm:$0x7f]
    %v28 = vpack.c.bf16 %v27, %v27
    %v29 = vld [vmem:[%s1] sm:$0xf]
    %v30 = vld [vmem:[%s1 + $0x4] sm:$0xf]
    %v31 = vld [vmem:[%s1 + $0x8] sm:$0xf]
    %v32 = vld [vmem:[%s1 + $0xc] sm:$0xf]
    %v33 = vld [vmem:[%s1 + $0x10] sm:$0xf]
    %v34 = vld [vmem:[%s1 + $0x14] sm:$0xf]
    %v35 = vld [vmem:[%s1 + $0x18] sm:$0xf]
    %v36 = vld [vmem:[%s1 + $0x1c] sm:$0xf]
    %v45 = vunpack.c.l.b16 %v29
    %v46 = vunpack.c.l.b16 %v30
    %v47 = vunpack.c.l.b16 %v31
    %v48 = vunpack.c.l.b16 %v32
    %v49 = vunpack.c.l.b16 %v33
    %v50 = vunpack.c.l.b16 %v34
    %v51 = vunpack.c.l.b16 %v35
    %v52 = vunpack.c.l.b16 %v36
    %v53 = vpack.c.b16 %v46, %v45
    %v54 = vpack.c.b16 %v48, %v47
    %v55 = vpack.c.b16 %v50, %v49
    %v56 = vpack.c.b16 %v52, %v51
    %vm57 = vcmask 56320
    %v59 = vsel %vm57, %v53, 0
    %v62 = vsel %vm57, %v54, 0
    %v65 = vsel %vm57, %v55, 0
    %v68 = vsel %vm57, %v56, 0
    %vm70 = vcmask 1042432
    %vm71 = vcmask 1043456
    %v72 = vsel %vm70, 4294967295, 65535
    %v73 = vsel %vm71, %v72, 0
    %v75 = vand.u32 %v28, %v73
    %77 = vmatprep.subr.bf16.mxu0 0
    %78 = vmatpush1.bf16.msra.mxu0 %v75
    %79 = vmatprep.subr.bf16.mxu0 0
    %80 = vmatpush1.bf16.msra.mxu0 0
    %81 = vmatprep.subr.bf16.mxu0 0
    %82 = vmatpush1.bf16.msra.mxu0 0
    %83 = vmatprep.subr.bf16.mxu0 0
    %84 = vmatpush1.bf16.msra.mxu0 0
    %85 = vmatprep.subr.bf16.mxu0 0
    %86 = vmatpush1.bf16.msra.mxu0 0
    %87 = vmatprep.subr.bf16.mxu0 0
    %88 = vmatpush1.bf16.msra.mxu0 0
    %89 = vmatprep.subr.bf16.mxu0 0
    %90 = vmatpush1.bf16.msra.mxu0 0
    %91 = vmatprep.subr.bf16.mxu0 0
    %92 = vmatpush1.bf16.msra.mxu0 0
    %93 = vmatprep.subr.bf16.mxu0 0
    %94 = vmatpush1.bf16.msra.mxu0 0
    %95 = vmatprep.subr.bf16.mxu0 0
    %96 = vmatpush1.bf16.msra.mxu0 0
    %97 = vmatprep.subr.bf16.mxu0 0
    %98 = vmatpush1.bf16.msra.mxu0 0
    %99 = vmatprep.subr.bf16.mxu0 0
    %100 = vmatpush1.bf16.msra.mxu0 0
    %101 = vmatprep.subr.bf16.mxu0 0
    %102 = vmatpush1.bf16.msra.mxu0 0
    %103 = vmatprep.subr.bf16.mxu0 0
    %104 = vmatpush1.bf16.msra.mxu0 0
    %105 = vmatprep.subr.bf16.mxu0 0
    %106 = vmatpush1.bf16.msra.mxu0 0
    %107 = vmatprep.subr.bf16.mxu0 0
    %108 = vmatpush1.bf16.msra.mxu0 0
    %109 = vmatprep.mubr.bf16.mxu0 0
    %110 = vmatmul.mubr.bf16.gmra.mrb[0].mxu0 %v59
    %v111 = vpop.f32.mrb[0].mxu0
    %v112 = vadd.f32 0.0, %v111
    %v113 = vpop.f32.mrb[0].mxu0
    %v114 = vpop.f32.mrb[0].mxu0
    %v115 = vadd.f32 0.0, %v114
    %v116 = vpop.f32.mrb[0].mxu0
    %117 = vmatprep.mubr.bf16.mxu0 0
    %118 = vmatmul.mubr.bf16.gmra.mrb[0].mxu0 %v62
    %v119 = vpop.f32.mrb[0].mxu0
    %v120 = vadd.f32 0.0, %v119
    %v121 = vpop.f32.mrb[0].mxu0
    %v122 = vpop.f32.mrb[0].mxu0
    %v123 = vadd.f32 0.0, %v122
    %v124 = vpop.f32.mrb[0].mxu0
    %125 = vmatprep.mubr.bf16.mxu0 0
    %126 = vmatmul.mubr.bf16.gmra.mrb[0].mxu0 %v65
    %v127 = vpop.f32.mrb[0].mxu0
    %v128 = vadd.f32 0.0, %v127
    %v129 = vpop.f32.mrb[0].mxu0
    %v130 = vpop.f32.mrb[0].mxu0
    %v131 = vadd.f32 0.0, %v130
    %v132 = vpop.f32.mrb[0].mxu0
    %133 = vmatprep.mubr.bf16.mxu0 0
    %134 = vmatmul.mubr.bf16.gmra.mrb[0].mxu0 %v68
    %v135 = vpop.f32.mrb[0].mxu0
    %v136 = vadd.f32 0.0, %v135
    %v137 = vpop.f32.mrb[0].mxu0
    %v138 = vpop.f32.mrb[0].mxu0
    %v139 = vadd.f32 0.0, %v138
    %v140 = vpop.f32.mrb[0].mxu0
    %141 = vdwg.mxu0
    %v142 = vmax.f32 %v112, 0.0
    %v143 = vmax.f32 %v115, 0.0
    %v144 = vmax.f32 %v120, 0.0
    %v145 = vmax.f32 %v123, 0.0
    %v146 = vmax.f32 %v128, 0.0
    %v147 = vmax.f32 %v131, 0.0
    %v148 = vmax.f32 %v136, 0.0
    %v149 = vmax.f32 %v139, 0.0
    %v150 = vld [vmem:[%s2] sm:$0xf]
    %v151 = vld [vmem:[%s2 + $0x4] sm:$0xf]
    %v152 = vld [vmem:[%s2 + $0x8] sm:$0xf]
    %v153 = vld [vmem:[%s2 + $0xc] sm:$0xf]
    %v154 = vpack.c.bf16 %v143, %v142
    %v155 = vpack.c.bf16 %v145, %v144
    %v156 = vpack.c.bf16 %v147, %v146
    %v157 = vpack.c.bf16 %v149, %v148
    %v158 = vld [vmem:[%s3] sm:$0xff]
    %v159 = vld [vmem:[%s3 + $0x8] sm:$0xff]
    %v160 = vld [vmem:[%s3 + $0x10] sm:$0xff]
    %v161 = vld [vmem:[%s3 + $0x18] sm:$0xff]
    %163 = vset.pattern.permute.xlu0 0
    %164 = vperm.xlu0 %163, %v158
    %v165 = vpop.permute.xlu0 %164
    %168 = vset.pattern.permute.xlu0 0
    %169 = vperm.xlu0 %168, %v159
    %v170 = vpop.permute.xlu0 %169
    %173 = vset.pattern.permute.xlu0 0
    %174 = vperm.xlu0 %173, %v160
    %v175 = vpop.permute.xlu0 %174
    %178 = vset.pattern.permute.xlu0 0
    %179 = vperm.xlu0 %178, %v161
    %v180 = vpop.permute.xlu0 %179
    %v186 = vunpack.c.l.b16 %v150
    %v187 = vunpack.c.l.b16 %v151
    %v188 = vunpack.c.l.b16 %v152
    %v189 = vunpack.c.l.b16 %v153
    %v190 = vpack.c.b16 %v187, %v186
    %v191 = vpack.c.b16 %v189, %v188
    %vm192 = vcmask 523264
    %v194 = vsel %vm192, %v190, 0
    %v197 = vsel %vm192, %v191, 0
    %199 = vmatprep.subr.bf16.mxu0 0
    %200 = vmatpush1.bf16.msra.mxu0 %v154
    %201 = vmatprep.subr.bf16.mxu0 0
    %202 = vmatpush1.bf16.msra.mxu0 %v155
    %203 = vmatprep.subr.bf16.mxu0 0
    %204 = vmatpush1.bf16.msra.mxu0 %v156
    %205 = vmatprep.subr.bf16.mxu0 0
    %206 = vmatpush1.bf16.msra.mxu0 %v157
    %207 = vmatprep.subr.bf16.mxu0 0
    %208 = vmatpush1.bf16.msra.mxu0 0
    %209 = vmatprep.subr.bf16.mxu0 0
    %210 = vmatpush1.bf16.msra.mxu0 0
    %211 = vmatprep.subr.bf16.mxu0 0
    %212 = vmatpush1.bf16.msra.mxu0 0
    %213 = vmatprep.subr.bf16.mxu0 0
    %214 = vmatpush1.bf16.msra.mxu0 0
    %215 = vmatprep.subr.bf16.mxu0 0
    %216 = vmatpush1.bf16.msra.mxu0 0
    %217 = vmatprep.subr.bf16.mxu0 0
    %218 = vmatpush1.bf16.msra.mxu0 0
    %219 = vmatprep.subr.bf16.mxu0 0
    %220 = vmatpush1.bf16.msra.mxu0 0
    %221 = vmatprep.subr.bf16.mxu0 0
    %222 = vmatpush1.bf16.msra.mxu0 0
    %223 = vmatprep.subr.bf16.mxu0 0
    %224 = vmatpush1.bf16.msra.mxu0 0
    %225 = vmatprep.subr.bf16.mxu0 0
    %226 = vmatpush1.bf16.msra.mxu0 0
    %227 = vmatprep.subr.bf16.mxu0 0
    %228 = vmatpush1.bf16.msra.mxu0 0
    %229 = vmatprep.subr.bf16.mxu0 0
    %230 = vmatpush1.bf16.msra.mxu0 0
    %231 = vmatprep.mubr.bf16.mxu0 0
    %232 = vmatmul.mubr.bf16.gmra.mrb[0].mxu0 %v194
    %v233 = vpop.f32.mrb[0].mxu0
    %v234 = vadd.f32 %v165, %v233
    %v235 = vpop.f32.mrb[0].mxu0
    %v236 = vpop.f32.mrb[0].mxu0
    %v237 = vadd.f32 %v170, %v236
    %v238 = vpop.f32.mrb[0].mxu0
    %239 = vmatprep.mubr.bf16.mxu0 0
    %240 = vmatmul.mubr.bf16.gmra.mrb[0].mxu0 %v197
    %v241 = vpop.f32.mrb[0].mxu0
    %v242 = vadd.f32 %v175, %v241
    %v243 = vpop.f32.mrb[0].mxu0
    %v244 = vpop.f32.mrb[0].mxu0
    %v245 = vadd.f32 %v180, %v244
    %v246 = vpop.f32.mrb[0].mxu0
    %247 = vdwg.mxu0
    %v248 = vmax.f32 %v234, 0.0
    %v249 = vmax.f32 %v237, 0.0
    %v250 = vmax.f32 %v242, 0.0
    %v251 = vmax.f32 %v245, 0.0
    %v252 = vld [vmem:[%s4] sm:$0x1]
    %v253 = vpack.c.bf16 %v249, %v248
    %v254 = vpack.c.bf16 %v251, %v250
    %v255 = vld [vmem:[#allocation2] sm:$0x1]
    %257 = vset.pattern.permute.xlu0 0
    %258 = vperm.xlu0 %257, %v255
    %v259 = vpop.permute.xlu0 %258
    %v261 = vlaneseq
    %v262 = vshrl.u32 %v261, 7
    %v263 = vsub.s32 0, %v262
    %v264 = vrot.slane %v259, %v263
    %vm265 = vcmask 261120
    %v267 = vsel %vm265, %v252, 0
    %269 = vmatprep.subr.bf16.mxu0 0
    %270 = vmatpush1.bf16.msra.mxu0 %v253
    %271 = vmatprep.subr.bf16.mxu0 0
    %272 = vmatpush1.bf16.msra.mxu0 %v254
    %273 = vmatprep.subr.bf16.mxu0 0
    %274 = vmatpush1.bf16.msra.mxu0 0
    %275 = vmatprep.subr.bf16.mxu0 0
    %276 = vmatpush1.bf16.msra.mxu0 0
    %277 = vmatprep.subr.bf16.mxu0 0
    %278 = vmatpush1.bf16.msra.mxu0 0
    %279 = vmatprep.subr.bf16.mxu0 0
    %280 = vmatpush1.bf16.msra.mxu0 0
    %281 = vmatprep.subr.bf16.mxu0 0
    %282 = vmatpush1.bf16.msra.mxu0 0
    %283 = vmatprep.subr.bf16.mxu0 0
    %284 = vmatpush1.bf16.msra.mxu0 0
    %285 = vmatprep.subr.bf16.mxu0 0
    %286 = vmatpush1.bf16.msra.mxu0 0
    %287 = vmatprep.subr.bf16.mxu0 0
    %288 = vmatpush1.bf16.msra.mxu0 0
    %289 = vmatprep.subr.bf16.mxu0 0
    %290 = vmatpush1.bf16.msra.mxu0 0
    %291 = vmatprep.subr.bf16.mxu0 0
    %292 = vmatpush1.bf16.msra.mxu0 0
    %293 = vmatprep.subr.bf16.mxu0 0
    %294 = vmatpush1.bf16.msra.mxu0 0
    %295 = vmatprep.subr.bf16.mxu0 0
    %296 = vmatpush1.bf16.msra.mxu0 0
    %297 = vmatprep.subr.bf16.mxu0 0
    %298 = vmatpush1.bf16.msra.mxu0 0
    %299 = vmatprep.subr.bf16.mxu0 0
    %300 = vmatpush1.bf16.msra.mxu0 0
    %301 = vmatprep.mubr.bf16.mxu0 0
    %302 = vmatmul.mubr.bf16.gmra.mrb[0].mxu0 %v267
    %v303 = vpop.f32.mrb[0].mxu0
    %v304 = vadd.f32 %v264, %v303
    %v305 = vpop.f32.mrb[0].mxu0
    %v306 = vpop.f32.mrb[0].mxu0
    %v307 = vpop.f32.mrb[0].mxu0
    %308 = vdwg.mxu0
    %vm309 = vcmp.ge.f32.partialorder %v304, 0.0
    %v310 = vsub.f32 0.0, %v304
    %v311 = vsel %vm309, %v310, %v304
    %v312 = vmul.f32 %v311, 1.442695
    %v313 = vpow.pop %v312
    %v314 = vadd.f32 %v313, 1.0
    %v315 = vrcp.pop %v314
    %v316 = vmul.f32 %v313, %v315
    %v317 = vsel %vm309, %v315, %v316
    %v318 = vsub.f32 %v27, 8.68
    %v319 = vmul.f32 %v318, 0.5988024
    %v320 = vsub.f32 %v27, 4.84
    %v321 = vmul.f32 %v320, 0.48076922
    %v322 = vmul.f32 %v321, %v321
    %v323 = vmul.f32 %v319, %v319
    %vm324 = vcmp.lt.f32.partialorder %v322, %v323
    %v325 = vsel %vm324, 1, 0
    %v326 = vcvt.s32.f32 %v325
    %327 = vst [vmem:[#allocation3] sm:$0x1] %v317
    %328 = vst [vmem:[#allocation3 - $0x4] sm:$0x20] %v326
    // Predicated region
    $region26: #{tpu_custom_call.1} parent=1 // pred_check
      _
    $region27: #{tpu_custom_call.1} parent=1 // pred_check_branch
      %330 = sbr.rel (0) target = $region29
    $region28: #{tpu_custom_call.1} parent=1 // pred_region
      %s332 = ssub.s32 32, 32
      %333 = vsyncadd [#allocation4], %s332
      %s335 = sshll.u32 [#allocation3], 4
      %s336 = int_to_ptr.vmem [resolvable:$true] %s335
      %338 = dma.vmem_to_hbm [thread:$0]  %s336, 32, %s6, [#allocation4]
    $region29: #{tpu_custom_call.1} parent=1 // pred_fallthru
      _
    // Predicated region
    $region30: #{tpu_custom_call.1} parent=1 // pred_check
      _
    $region31: #{tpu_custom_call.1} parent=1 // pred_check_branch
      %340 = sbr.rel (0) target = $region33
    $region32: #{tpu_custom_call.1} parent=1 // pred_region
      %341 = dma.done [#allocation4], 32
    $region33: #{tpu_custom_call.1} parent=1 // pred_fallthru
      _
    %342 = vsyncpa [#allocation4], 1

</llo_original>
